<compile_context>
chip_gen: v6e
topology: v6e:2x2x1
jax: 0.10.0
libtpu: 0.0.40
codegen_flags: <defaults>
</compile_context>

<pallas_src>
import functools
import math

import jax
import jax.numpy as jnp
from jax.experimental import pallas as pl
from jax.experimental.pallas import tpu as pltpu


# ---------------------------------------------------------------------------
# Small helpers
# ---------------------------------------------------------------------------

def _cdiv(a, b):
    return -(-a // b)


def _round_up(x, m):
    return ((x + m - 1) // m) * m


def _vmem_capacity_bytes():
    """Per-core VMEM (128 MiB v5e/v6e, 64 MiB v7x); conservative fallback."""
    try:
        cap = int(pltpu.get_tpu_info().vmem_capacity_bytes)
        if cap > 0:
            return cap
    except Exception:
        pass
    return 64 * 1024 * 1024


# ---------------------------------------------------------------------------
# Kernels
# ---------------------------------------------------------------------------

def _affine_kernel(x_ref, w_ref, b_ref, o_ref):
    """Collapsed identity-activation network: y = x @ W + b (W may be the
    block-diagonal packed weight; the kernel is layout-agnostic)."""
    h = jnp.dot(x_ref[...], w_ref[...], preferred_element_type=jnp.float32)
    o_ref[...] = (h + b_ref[...].astype(jnp.float32)).astype(o_ref.dtype)


def _affine_kernel_nobias(x_ref, w_ref, o_ref):
    o_ref[...] = jnp.dot(x_ref[...], w_ref[...],
                         preferred_element_type=jnp.float32).astype(o_ref.dtype)


def _mlp_kernel(*refs, num_layers, use_bias, hidden_act, output_act):
    """General fused MLP. refs = (x, w0[, b0], w1[, b1], ..., out)."""
    x_ref, o_ref = refs[0], refs[-1]
    param_refs = refs[1:-1]
    per_layer = 2 if use_bias else 1

    h = x_ref[...].astype(jnp.float32)
    for i in range(num_layers):
        w = param_refs[per_layer * i][...].astype(jnp.float32)
        h = jnp.dot(h, w, preferred_element_type=jnp.float32)
        if use_bias:
            h = h + param_refs[per_layer * i + 1][...].astype(jnp.float32)
        act = output_act if i == num_layers - 1 else hidden_act
        if act == "relu":
            h = jnp.maximum(h, 0.0)
        elif act == "tanh":
            h = jnp.tanh(h)
        elif act == "softmax":
            # softmax over dim=1 (feature axis); exact reciprocal so that
            # rows sum to 1 (cost is negligible at these widths).
            m = jnp.max(h, axis=1, keepdims=True)
            e = jnp.exp(h - m)
            h = e / jnp.sum(e, axis=1, keepdims=True)
        # "identity": nothing to do
    o_ref[...] = h.astype(o_ref.dtype)


# ---------------------------------------------------------------------------
# Wrapper
# ---------------------------------------------------------------------------

_SUPPORTED_ACTS = ("identity", "relu", "tanh", "softmax")


class LinearNetworkPallas:
    """JAX/Pallas equivalent of LinearNetwork (defaults: identity activations)."""

    def __init__(self, input_features, hidden_layers, output_features,
                 activation_function="identity", output_activation="identity",
                 bias=True, key=None, stream_dtype=None, max_tile_rows=None):
        assert activation_function in _SUPPORTED_ACTS
        assert output_activation in _SUPPORTED_ACTS
        if key is None:
            key = jax.random.PRNGKey(0)

        self.hidden_act = activation_function
        self.output_act = output_activation
        self.use_bias = bias
        self.input_features = int(input_features)
        self.output_features = int(output_features)
        self.param_dtype = (jnp.dtype(stream_dtype) if stream_dtype is not None
                            else jnp.dtype(jnp.float32))
        self.max_tile_rows = max_tile_rows          # optional cap (testing / tuning)

        layer_sizes = list(hidden_layers) + [self.output_features]

        # f32 master parameters (nn.Linear's U(-1/sqrt(fan_in), 1/sqrt(fan_in))).
        self.params = []   # list of (W (in,out), b (1,out) or None)
        last = self.input_features
        for nxt in layer_sizes:
            key, kw, kb = jax.random.split(key, 3)
            bound = 1.0 / (last ** 0.5)
            w = jax.random.uniform(kw, (last, nxt), jnp.float32,
                                   minval=-bound, maxval=bound)
            b = (jax.random.uniform(kb, (1, nxt), jnp.float32,
                                    minval=-bound, maxval=bound) if bias else None)
            self.params.append((w, b))
            last = nxt

        # Streamed copies (optionally bf16) for the general fused-MLP path.
        self.stream_params = [(w.astype(self.param_dtype),
                               None if b is None else b.astype(self.param_dtype))
                              for w, b in self.params]

        # Identity activations everywhere => the whole chain is one affine map.
        self.collapsed = (activation_function == "identity"
                          and output_activation == "identity")
        self.pack = 1
        self.w_stream = None
        self.b_stream = None
        if self.collapsed:
            w_eff, b_eff = self.params[0]
            for w, b in self.params[1:]:
                w_eff = w_eff @ w
                if b_eff is not None:
                    b_eff = b_eff @ w
                if b is not None:
                    b_eff = b if b_eff is None else b_eff + b

            # Lane-dense packing: P batch rows per packed row so that both the
            # packed input width (P*in_f) and output width (P*out_f) are
            # multiples of 128 lanes.  Folded weight becomes kron(I_P, W_eff).
            in_f, out_f = self.input_features, self.output_features
            p = math.lcm(128 // math.gcd(in_f, 128), 128 // math.gcd(out_f, 128))
            self.pack = p if p <= 32 else 1   # keep block-diag weight small
            if self.pack > 1:
                w_eff = jnp.kron(jnp.eye(self.pack, dtype=jnp.float32), w_eff)
                if b_eff is not None:
                    b_eff = jnp.tile(b_eff, (1, self.pack))
            self.w_stream = w_eff.astype(self.param_dtype)
            self.b_stream = None if b_eff is None else b_eff.astype(self.param_dtype)

    # -- tile sizing ----------------------------------------------------------
    def _plan_tiles(self, rows, bytes_per_row, row_align):
        """Pick tile rows from the VMEM budget; keep the grid TC-balanced."""
        vmem_cap = _vmem_capacity_bytes()
        tile_budget = int(vmem_cap * 0.45)        # headroom for params/scratch
        tr = (tile_budget // max(bytes_per_row, 1)) // row_align * row_align
        tr = max(row_align, min(tr, 32768))
        if self.max_tile_rows is not None:
            tr = min(tr, max(row_align, _round_up(int(self.max_tile_rows), row_align)))

        if rows <= tr:
            return rows, 1, vmem_cap              # single full-dim block (always legal)

        n_tiles = _cdiv(rows, tr)
        # v7x has two TensorCores sharing the "parallel" grid axis: avoid a
        # small odd tile count that leaves one core with an extra tile.
        if n_tiles > 1 and n_tiles % 2 == 1:
            n_tiles += 1
            tr = _round_up(_cdiv(rows, n_tiles), row_align)
            n_tiles = _cdiv(rows, tr)
        return tr, n_tiles, vmem_cap

    @staticmethod
    def _compiler_params(needed_bytes, vmem_cap):
        limit = int(min(vmem_cap * 0.9, max(needed_bytes * 1.25, 32 * 1024 * 1024)))
        return pltpu.CompilerParams(dimension_semantics=("parallel",),
                                    vmem_limit_bytes=limit)

    # -- collapsed (identity) path --------------------------------------------
    def _forward_affine(self, x):
        batch, in_f = x.shape
        out_f = self.output_features
        out_dtype = x.dtype
        P = self.pack

        padded_batch = _round_up(batch, P)
        if padded_batch != batch:
            # TODO(synk): replace this (at most P-1 rows of) alignment pad with a
            # masked tail block so misaligned batches avoid the extra pass over x.
            x = jnp.pad(x, ((0, padded_batch - batch), (0, 0)))
        rows = padded_batch // P
        xw = in_f * P          # packed x width  (multiple of 128 when P > 1)
        ow = out_f * P         # packed out width (multiple of 128 when P > 1)

        x2 = x.reshape(rows, xw)   # contiguous row-major reshape: free bitcast

        itm_x = jnp.dtype(x.dtype).itemsize
        itm_o = jnp.dtype(out_dtype).itemsize
        row_align = 8 if (itm_x >= 4 and itm_o >= 4
                          and self.param_dtype.itemsize >= 4) else 16
        # Double-buffered x/out tiles (lanes pad to 128) + f32 accumulator/spill.
        bytes_per_row = (2 * _round_up(xw, 128) * itm_x
                         + 2 * _round_up(ow, 128) * itm_o
                         + _round_up(ow, 128) * 4)
        tr, n_tiles, vmem_cap = self._plan_tiles(rows, bytes_per_row, row_align)

        x_spec = pl.BlockSpec((tr, xw), lambda i: (i, 0))
        o_spec = pl.BlockSpec((tr, ow), lambda i: (i, 0))
        args = [x2, self.w_stream]
        in_specs = [x_spec, pl.BlockSpec(self.w_stream.shape, lambda i: (0, 0))]
        kernel = _affine_kernel_nobias
        if self.b_stream is not None:
            args.append(self.b_stream)
            in_specs.append(pl.BlockSpec(self.b_stream.shape, lambda i: (0, 0)))
            kernel = _affine_kernel

        param_bytes = sum(int(a.size) * jnp.dtype(a.dtype).itemsize for a in args[1:])
        needed = tr * bytes_per_row + 2 * param_bytes + (2 << 20)

        out = pl.pallas_call(
            kernel,
            out_shape=jax.ShapeDtypeStruct((rows, ow), out_dtype),
            grid=(n_tiles,),                      # partial last block is masked
            in_specs=in_specs,
            out_specs=o_spec,
            compiler_params=self._compiler_params(needed, vmem_cap),
        )(*args)

        out = out.reshape(padded_batch, out_f)    # free bitcast back
        return out if padded_batch == batch else out[:batch]

    # -- general fused-MLP path ------------------------------------------------
    def _forward_mlp(self, x):
        batch, in_f = x.shape
        out_f = self.output_features
        out_dtype = x.dtype
        itm_x = jnp.dtype(x.dtype).itemsize
        itm_o = jnp.dtype(out_dtype).itemsize
        row_align = 8 if (itm_x >= 4 and itm_o >= 4
                          and self.param_dtype.itemsize >= 4) else 16

        widths = [in_f] + [w.shape[1] for w, _ in self.params]
        # x/out tiles double-buffered (lanes pad to 128) + every f32 intermediate.
        bytes_per_row = (2 * _round_up(in_f, 128) * itm_x
                         + 2 * _round_up(out_f, 128) * itm_o
                         + sum(_round_up(wd, 128) * 4 for wd in widths))
        tb, n_tiles, vmem_cap = self._plan_tiles(batch, bytes_per_row, row_align)

        flat = []
        for w, b in self.stream_params:
            flat.append(w)
            if self.use_bias:
                flat.append(b)

        x_spec = pl.BlockSpec((tb, in_f), lambda i: (i, 0))
        o_spec = pl.BlockSpec((tb, out_f), lambda i: (i, 0))
        in_specs = [x_spec] + [pl.BlockSpec(p.shape, lambda i: (0, 0)) for p in flat]
        param_bytes = sum(int(p.size) * jnp.dtype(p.dtype).itemsize for p in flat)
        needed = tb * bytes_per_row + 2 * param_bytes + (2 << 20)

        kernel = functools.partial(
            _mlp_kernel, num_layers=len(self.params), use_bias=self.use_bias,
            hidden_act=self.hidden_act, output_act=self.output_act)

        return pl.pallas_call(
            kernel,
            out_shape=jax.ShapeDtypeStruct((batch, out_f), out_dtype),
            grid=(n_tiles,),                      # partial last block is masked
            in_specs=in_specs,
            out_specs=o_spec,
            compiler_params=self._compiler_params(needed, vmem_cap),
        )(x, *flat)

    # -- forward ---------------------------------------------------------------
    def __call__(self, x):
        assert x.ndim == 2 and x.shape[1] == self.input_features
        if self.collapsed:
            return self._forward_affine(x)
        return self._forward_mlp(x)


# ---------------------------------------------------------------------------
# Plain-JAX reference (mirrors the PyTorch forward, f32 master params)
# ---------------------------------------------------------------------------

def _reference_forward(x, params, hidden_act, output_act):
    h = x.astype(jnp.float32)
    n = len(params)
    for i, (w, b) in enumerate(params):
        h = h @ w
        if b is not None:
            h = h + b
        act = output_act if i == n - 1 else hidden_act
        if act == "relu":
            h = jnp.maximum(h, 0.0)
        elif act == "tanh":
            h = jnp.tanh(h)
        elif act == "softmax":
            h = jax.nn.softmax(h, axis=1)
    return h


if __name__ == "__main__":
    key = jax.random.PRNGKey(0)
    k_x, k_net1, k_net2 = jax.random.split(key, 3)

    batch = 4
    input_features = 16
    hidden_layers = [32, 32]
    output_features = 8

    x = jax.random.normal(k_x, (batch, input_features), jnp.float32)

    # 1) Default configuration (identity/identity) -> collapsed lane-dense kernel.
    net = LinearNetworkPallas(input_features, list(hidden_layers), output_features,
                              activation_function="identity",
                              output_activation="identity",
                              bias=True, key=k_net1)
    out = jax.block_until_ready(net(x))
    ref = _reference_forward(x, net.params, "identity", "identity")
    assert out.shape == (batch, output_features) and out.dtype == x.dtype
    assert jnp.allclose(out, ref, atol=1e-4, rtol=1e-4), "identity-net mismatch"

    # 2) relu hidden + softmax(dim=1) output -> general fused kernel.
    net2 = LinearNetworkPallas(input_features, list(hidden_layers), output_features,
                               activation_function="relu",
                               output_activation="softmax",
                               bias=True, key=k_net2)
    out2 = jax.block_until_ready(net2(x))
    ref2 = _reference_forward(x, net2.params, "relu", "softmax")
    assert jnp.allclose(out2, ref2, atol=1e-4, rtol=1e-4), "relu/softmax mismatch"
    assert jnp.allclose(jnp.sum(out2, axis=1), 1.0, atol=1e-4), "softmax not normalized"

    # 3) Batch not a multiple of the pack factor -> small alignment pad path.
    xb = jax.random.normal(jax.random.PRNGKey(42), (1000, input_features), jnp.float32)
    outb = jax.block_until_ready(net(xb))
    refb = _reference_forward(xb, net.params, "identity", "identity")
    assert outb.shape == (1000, output_features)
    assert jnp.allclose(outb, refb, atol=1e-4, rtol=1e-4), "padded-batch mismatch"

    # 4) Multi-tile grid with a partial (masked) last block and no padding at all
    #    (batch divisible by the pack factor but not by the tile size).
    xc = jax.random.normal(jax.random.PRNGKey(7), (16 * 513, input_features), jnp.float32)
    net.max_tile_rows = 64            # force several tiles for testing
    outc = jax.block_until_ready(net(xc))
    net.max_tile_rows = None
    refc = _reference_forward(xc, net.params, "identity", "identity")
    assert outc.shape == (16 * 513, output_features)
    assert jnp.allclose(outc, refc, atol=1e-4, rtol=1e-4), "multi-tile mismatch"

    # 5) bf16 streaming (weights + activations), f32 accumulation in-kernel.
    net_bf = LinearNetworkPallas(input_features, list(hidden_layers), output_features,
                                 activation_function="identity",
                                 output_activation="identity",
                                 bias=True, key=k_net1, stream_dtype=jnp.bfloat16)
    out_bf = jax.block_until_ready(net_bf(x.astype(jnp.bfloat16)))
    assert out_bf.dtype == jnp.bfloat16
    assert jnp.allclose(out_bf.astype(jnp.float32), ref, atol=3e-2, rtol=5e-2), \
        "bf16-stream mismatch"

    print("KERNEL_OK")
</pallas_src>

<mosaic_0001>
module attributes {stable_mosaic.version = 11 : i64} {
  func.func @_affine_kernel(%arg0: i32, %arg1: memref<1x256xf32, #tpu.memory_space<vmem>>, %arg2: memref<256x128xf32, #tpu.memory_space<vmem>>, %arg3: memref<1x128xf32, #tpu.memory_space<vmem>>, %arg4: memref<1x128xf32, #tpu.memory_space<vmem>>) attributes {dimension_semantics = [#tpu.dimension_semantics<parallel>], iteration_bounds = array<i64: 1>, scalar_prefetch = 0 : i64, scratch_operands = 0 : i64, tpu.core_type = #tpu.core_type<tc>, window_params = [{transform_indices = @transform_0, window_bounds = array<i64: 1, 256>}, {pipeline_mode = #tpu.pipeline_mode<synchronous>, transform_indices = @transform_1, window_bounds = array<i64: 256, 128>}, {pipeline_mode = #tpu.pipeline_mode<synchronous>, transform_indices = @transform_2, window_bounds = array<i64: 1, 128>}, {transform_indices = @transform_3, window_bounds = array<i64: 1, 128>}]} {
    %c0 = arith.constant 0 : index
    %c0_0 = arith.constant 0 : index
    %0 = vector.load %arg1[%c0, %c0_0] : memref<1x256xf32, #tpu.memory_space<vmem>>, vector<1x256xf32>
    %c0_1 = arith.constant 0 : index
    %c0_2 = arith.constant 0 : index
    %1 = vector.load %arg2[%c0_1, %c0_2] : memref<256x128xf32, #tpu.memory_space<vmem>>, vector<256x128xf32>
    %cst = arith.constant dense<0.000000e+00> : vector<1x128xf32>
    %2 = tpu.matmul %0, %1, %cst {dimension_numbers = #tpu.dot_dimension_numbers<[1], [0], [0], [1], [0, 0, 1, 1], [], []>} : vector<1x256xf32>, vector<256x128xf32>, vector<1x128xf32> -> vector<1x128xf32>
    %c0_3 = arith.constant 0 : index
    %c0_4 = arith.constant 0 : index
    %3 = vector.load %arg3[%c0_3, %c0_4] : memref<1x128xf32, #tpu.memory_space<vmem>>, vector<1x128xf32>
    %4 = arith.addf %2, %3 : vector<1x128xf32>
    %c0_5 = arith.constant 0 : index
    %c0_6 = arith.constant 0 : index
    %5 = vector.load %arg4[%c0_5, %c0_6] : memref<1x128xf32, #tpu.memory_space<vmem>>, vector<1x128xf32>
    tpu.vector_store %arg4[%c0_5, %c0_6], %4 {strides = array<i32>} : memref<1x128xf32, #tpu.memory_space<vmem>>, vector<1x128xf32>,
    return
  }
  func.func @transform_0(%arg0: i32) -> (i32, i32) {
    %c0_i32 = arith.constant 0 : i32
    %c0_i32_0 = arith.constant 0 : i32
    return %arg0, %c0_i32 : i32, i32
  }
  func.func @transform_1(%arg0: i32) -> (i32, i32) {
    %c0_i32 = arith.constant 0 : i32
    %c0_i32_0 = arith.constant 0 : i32
    %c0_i32_1 = arith.constant 0 : i32
    return %c0_i32, %c0_i32_0 : i32, i32
  }
  func.func @transform_2(%arg0: i32) -> (i32, i32) {
    %c0_i32 = arith.constant 0 : i32
    %c0_i32_0 = arith.constant 0 : i32
    %c0_i32_1 = arith.constant 0 : i32
    return %c0_i32, %c0_i32_0 : i32, i32
  }
  func.func @transform_3(%arg0: i32) -> (i32, i32) {
    %c0_i32 = arith.constant 0 : i32
    %c0_i32_0 = arith.constant 0 : i32
    return %arg0, %c0_i32 : i32, i32
  }
}

</mosaic_0001>

<llo_original>
// kernel: tpu_custom_call.1
$region0: #{tpu_custom_call.1}
  #allocation0 [shape = 'u32[]', space=smem, size = 0x4, offset = 0x4, fixed_abs, tag = 'smem constant byte address 0x4 - core index']
  #allocation1 [shape = 'u32[144,128]{1,0:T(1,128)}', space=vmem, size = 0x12000, scoped, tag = 'internal scratch']
  %s0 = inlined_call_operand.hbm [shape: f32[1,256], index: 0, kind: input, shape index: {}]
  %s1 = inlined_call_operand.hbm [shape: f32[256,128], index: 1, kind: input, shape index: {}]
  %s2 = inlined_call_operand.vmem [shape: f32[1,128], index: 2, kind: input, shape index: {}]
  %s3 = inlined_call_operand.hbm [shape: f32[1,128], index: 3, kind: output, shape index: {}]
  %s4 = sld [smem:[#allocation0]]
  $region30: #{tpu_custom_call.1} parent=0
    _
  %s6 = ssub.s32 1, %s4
  %s7 = scalar_select 0, %s6, %s4
  $region1: #{tpu_custom_call.1} parent=0
    #allocation2 [shape = 'u8[1024]{0}', space=vmem, size = 0x400, scoped, tag = 'input window, operand 0, single buffered']
    #allocation3 [shape = 's32[1]{0}', space=sflag, size = 0x4, scoped, tag = 'scoped memory for tpu_custom_call.1']
    #allocation4 [shape = 's32[1]{0}', space=sflag, size = 0x4, scoped, tag = 'scoped memory for tpu_custom_call.1']
    #allocation5 [shape = 'u8[131072]{0}', space=vmem, size = 0x20000, scoped, tag = 'input window, operand 1, single buffered']
    #allocation6 [shape = 's32[1]{0}', space=sflag, size = 0x4, scoped, tag = 'scoped memory for tpu_custom_call.1']
    #allocation7 [shape = 'u8[512]{0}', space=vmem, size = 0x400, scoped, tag = 'output window, operand 0, single buffered']
    %8 = vsyncpa [#allocation3], 0
    %9 = vsyncpa [#allocation6], 0
    %10 = vsyncpa [#allocation4], 0
    // Predicated region
    $region2: #{tpu_custom_call.1} parent=1 // pred_check
      _
    $region3: #{tpu_custom_call.1} parent=1 // pred_check_branch
      %12 = sbr.rel (0) target = $region5
    $region4: #{tpu_custom_call.1} parent=1 // pred_region
      %s14 = ssub.s32 32, 32
      %15 = vsyncadd [#allocation3], %s14
      %s17 = sshll.u32 [#allocation2], 4
      %s18 = int_to_ptr.vmem [resolvable:$true] %s17
      %20 = dma.hbm_to_vmem [thread:$0]  %s0, 32, %s18, [#allocation3]
    $region5: #{tpu_custom_call.1} parent=1 // pred_fallthru
      _
    // Predicated region
    $region6: #{tpu_custom_call.1} parent=1 // pred_check
      _
    $region7: #{tpu_custom_call.1} parent=1 // pred_check_branch
      %22 = sbr.rel (0) target = $region9
    $region8: #{tpu_custom_call.1} parent=1 // pred_region
      %s24 = ssub.s32 4096, 4096
      %25 = vsyncadd [#allocation6], %s24
      %s26 = sshll.u32 [#allocation5], 4
      %s27 = int_to_ptr.vmem [resolvable:$true] %s26
      %32 = dma.hbm_to_vmem [thread:$0]  %s1, 4096, %s27, [#allocation6], 128, 128, 8
    $region9: #{tpu_custom_call.1} parent=1 // pred_fallthru
      _
    // Predicated region
    $region10: #{tpu_custom_call.1} parent=1 // pred_check
      _
    $region11: #{tpu_custom_call.1} parent=1 // pred_check_branch
      %34 = sbr.rel (0) target = $region13
    $region12: #{tpu_custom_call.1} parent=1 // pred_region
      _
    $region13: #{tpu_custom_call.1} parent=1 // pred_fallthru
      _
    // Predicated region
    $region14: #{tpu_custom_call.1} parent=1 // pred_check
      _
    $region15: #{tpu_custom_call.1} parent=1 // pred_check_branch
      %36 = sbr.rel (0) target = $region17
    $region16: #{tpu_custom_call.1} parent=1 // pred_region
      %37 = dma.done [#allocation3], 32
    $region17: #{tpu_custom_call.1} parent=1 // pred_fallthru
      _
    // Predicated region
    $region18: #{tpu_custom_call.1} parent=1 // pred_check
      _
    $region19: #{tpu_custom_call.1} parent=1 // pred_check_branch
      %39 = sbr.rel (0) target = $region21
    $region20: #{tpu_custom_call.1} parent=1 // pred_region
      %40 = dma.done [#allocation6], 4096
    $region21: #{tpu_custom_call.1} parent=1 // pred_fallthru
      _
    %v41 = vld [vmem:[#allocation2] sm:$0x3]
    %v42 = vld [vmem:[#allocation5] sm:$0xff]
    %v43 = vld [vmem:[#allocation5 + $0x8] sm:$0xff]
    %v44 = vld [vmem:[#allocation5 + $0x10] sm:$0xff]
    %v45 = vld [vmem:[#allocation5 + $0x18] sm:$0xff]
    %v46 = vld [vmem:[#allocation5 + $0x20] sm:$0xff]
    %v47 = vld [vmem:[#allocation5 + $0x28] sm:$0xff]
    %v48 = vld [vmem:[#allocation5 + $0x30] sm:$0xff]
    %v49 = vld [vmem:[#allocation5 + $0x38] sm:$0xff]
    %v50 = vld [vmem:[#allocation5 + $0x40] sm:$0xff]
    %v51 = vld [vmem:[#allocation5 + $0x48] sm:$0xff]
    %v52 = vld [vmem:[#allocation5 + $0x50] sm:$0xff]
    %v53 = vld [vmem:[#allocation5 + $0x58] sm:$0xff]
    %v54 = vld [vmem:[#allocation5 + $0x60] sm:$0xff]
    %v55 = vld [vmem:[#allocation5 + $0x68] sm:$0xff]
    %v56 = vld [vmem:[#allocation5 + $0x70] sm:$0xff]
    %v57 = vld [vmem:[#allocation5 + $0x78] sm:$0xff]
    %v58 = vld [vmem:[#allocation5 + $0x80] sm:$0xff]
    %v59 = vld [vmem:[#allocation5 + $0x88] sm:$0xff]
    %v60 = vld [vmem:[#allocation5 + $0x90] sm:$0xff]
    %v61 = vld [vmem:[#allocation5 + $0x98] sm:$0xff]
    %v62 = vld [vmem:[#allocation5 + $0xa0] sm:$0xff]
    %v63 = vld [vmem:[#allocation5 + $0xa8] sm:$0xff]
    %v64 = vld [vmem:[#allocation5 + $0xb0] sm:$0xff]
    %v65 = vld [vmem:[#allocation5 + $0xb8] sm:$0xff]
    %v66 = vld [vmem:[#allocation5 + $0xc0] sm:$0xff]
    %v67 = vld [vmem:[#allocation5 + $0xc8] sm:$0xff]
    %v68 = vld [vmem:[#allocation5 + $0xd0] sm:$0xff]
    %v69 = vld [vmem:[#allocation5 + $0xd8] sm:$0xff]
    %v70 = vld [vmem:[#allocation5 + $0xe0] sm:$0xff]
    %v71 = vld [vmem:[#allocation5 + $0xe8] sm:$0xff]
    %v72 = vld [vmem:[#allocation5 + $0xf0] sm:$0xff]
    %v73 = vld [vmem:[#allocation5 + $0xf8] sm:$0xff]
    %v74 = vld [vmem:[%s2] sm:$0x1]
    %v76 = vlaneseq
    %v77 = vshrl.u32 %v76, 7
    %v78 = vsub.s32 0, %v77
    %v79 = vrot.slane %v41, %v78
    %v80 = vlaneseq
    %v81 = vshrl.u32 %v80, 7
    %v82 = vsub.s32 1, %v81
    %v83 = vrot.slane %v41, %v82
    %86 = vmatprep.subr.mxu0 0.0
    %87 = vmatpush1.msra.mxu0 %v57
    %88 = vmatprep.subr.mxu0 0.0
    %89 = vmatpush1.msra.mxu0 %v56
    %90 = vmatprep.subr.mxu0 0.0
    %91 = vmatpush1.msra.mxu0 %v55
    %92 = vmatprep.subr.mxu0 0.0
    %93 = vmatpush1.msra.mxu0 %v54
    %94 = vmatprep.subr.mxu0 0.0
    %95 = vmatpush1.msra.mxu0 %v53
    %96 = vmatprep.subr.mxu0 0.0
    %97 = vmatpush1.msra.mxu0 %v52
    %98 = vmatprep.subr.mxu0 0.0
    %99 = vmatpush1.msra.mxu0 %v51
    %100 = vmatprep.subr.mxu0 0.0
    %101 = vmatpush1.msra.mxu0 %v50
    %102 = vmatprep.subr.mxu0 0.0
    %103 = vmatpush1.msra.mxu0 %v49
    %104 = vmatprep.subr.mxu0 0.0
    %105 = vmatpush1.msra.mxu0 %v48
    %106 = vmatprep.subr.mxu0 0.0
    %107 = vmatpush1.msra.mxu0 %v47
    %108 = vmatprep.subr.mxu0 0.0
    %109 = vmatpush1.msra.mxu0 %v46
    %110 = vmatprep.subr.mxu0 0.0
    %111 = vmatpush1.msra.mxu0 %v45
    %112 = vmatprep.subr.mxu0 0.0
    %113 = vmatpush1.msra.mxu0 %v44
    %114 = vmatprep.subr.mxu0 0.0
    %115 = vmatpush1.msra.mxu0 %v43
    %116 = vmatprep.subr.mxu0 0.0
    %117 = vmatpush1.msra.mxu0 %v42
    %118 = vmatprep.subr.mxu0 0.0
    %119 = vmatpush2.msra.mxu0 %v73
    %120 = vmatprep.subr.mxu0 0.0
    %121 = vmatpush2.msra.mxu0 %v72
    %122 = vmatprep.subr.mxu0 0.0
    %123 = vmatpush2.msra.mxu0 %v71
    %124 = vmatprep.subr.mxu0 0.0
    %125 = vmatpush2.msra.mxu0 %v70
    %126 = vmatprep.subr.mxu0 0.0
    %127 = vmatpush2.msra.mxu0 %v69
    %128 = vmatprep.subr.mxu0 0.0
    %129 = vmatpush2.msra.mxu0 %v68
    %130 = vmatprep.subr.mxu0 0.0
    %131 = vmatpush2.msra.mxu0 %v67
    %132 = vmatprep.subr.mxu0 0.0
    %133 = vmatpush2.msra.mxu0 %v66
    %134 = vmatprep.subr.mxu0 0.0
    %135 = vmatpush2.msra.mxu0 %v65
    %136 = vmatprep.subr.mxu0 0.0
    %137 = vmatpush2.msra.mxu0 %v64
    %138 = vmatprep.subr.mxu0 0.0
    %139 = vmatpush2.msra.mxu0 %v63
    %140 = vmatprep.subr.mxu0 0.0
    %141 = vmatpush2.msra.mxu0 %v62
    %142 = vmatprep.subr.mxu0 0.0
    %143 = vmatpush2.msra.mxu0 %v61
    %144 = vmatprep.subr.mxu0 0.0
    %145 = vmatpush2.msra.mxu0 %v60
    %146 = vmatprep.subr.mxu0 0.0
    %147 = vmatpush2.msra.mxu0 %v59
    %148 = vmatprep.subr.mxu0 0.0
    %149 = vmatpush2.msra.mxu0 %v58
    %150 = vmatprep.mubr.f32.mxu0 %v83
    %151 = vmatmul.mubr.f32.gmra.mxu0 %v79
    %v152 = vpop.f32.mrf.mxu0
    %v153 = vadd.f32 %v74, %v152
    %v154 = vpop.f32.mrf.mxu0
    %155 = vdwg.mxu0
    %156 = vst [vmem:[#allocation7] sm:$0x1] %v153
    // Predicated region
    $region22: #{tpu_custom_call.1} parent=1 // pred_check
      _
    $region23: #{tpu_custom_call.1} parent=1 // pred_check_branch
      %158 = sbr.rel (0) target = $region25
    $region24: #{tpu_custom_call.1} parent=1 // pred_region
      %s160 = ssub.s32 16, 16
      %161 = vsyncadd [#allocation4], %s160
      %s163 = sshll.u32 [#allocation7], 4
      %s164 = int_to_ptr.vmem [resolvable:$true] %s163
      %166 = dma.vmem_to_hbm [thread:$0]  %s164, 16, %s3, [#allocation4]
    $region25: #{tpu_custom_call.1} parent=1 // pred_fallthru
      _
    // Predicated region
    $region26: #{tpu_custom_call.1} parent=1 // pred_check
      _
    $region27: #{tpu_custom_call.1} parent=1 // pred_check_branch
      %168 = sbr.rel (0) target = $region29
    $region28: #{tpu_custom_call.1} parent=1 // pred_region
      %169 = dma.done [#allocation4], 16
    $region29: #{tpu_custom_call.1} parent=1 // pred_fallthru
      _
    %170 = vsyncpa [#allocation3], 1
    %171 = vsyncpa [#allocation6], 1
    %172 = vsyncpa [#allocation4], 1

</llo_original>
